<compile_context>
chip_gen: v6e
topology: v6e:2x2x1
jax: 0.10.0
libtpu: 0.0.40
codegen_flags: <defaults>
</compile_context>

<pallas_src>
import jax
import jax.numpy as jnp
from jax import lax
from jax.experimental import pallas as pl
from jax.experimental.pallas import tpu as pltpu

INPUT_DIM = 2
LATENT_DIM = 20
CONDITION_DIM = 2
HIDDEN_DIM = 128

# Packed output layout (lane-dense, one 128-wide f32 slab per row):
#   lanes [0:20)  = mu
#   lanes [20:40) = logvar
#   lanes [40:42) = recon
#   lanes [42:128) = padding (junk, never read)
OUT_LANES = 128
RECON_OFF = 2 * LATENT_DIM  # 40


def _round_up(x, m):
    return ((x + m - 1) // m) * m


def cvae_kernel(
    x_ref,      # (TB, INPUT_DIM)
    cond_ref,   # (TB, CONDITION_DIM)
    eps_ref,    # (TB, LATENT_DIM)
    ew1x_ref,   # (INPUT_DIM, HIDDEN)       encoder fc1 rows acting on x
    ew1c_ref,   # (CONDITION_DIM, HIDDEN)   encoder fc1 rows acting on condition
    eb1_ref,    # (1, HIDDEN)
    ewh_ref,    # (HIDDEN, OUT_LANES)       packed heads: [W_mu | W_logvar | 0]
    ebh_ref,    # (1, OUT_LANES)            packed heads bias
    dw1z_ref,   # (LATENT_DIM, HIDDEN)      decoder fc1 rows acting on z
    dw1c_ref,   # (CONDITION_DIM, HIDDEN)   decoder fc1 rows acting on condition
    db1_ref,    # (1, HIDDEN)
    dw2_ref,    # (HIDDEN, OUT_LANES)       decoder fc2 padded into recon lanes
    db2_ref,    # (1, OUT_LANES)
    out_ref,    # (TB, OUT_LANES)           packed output slab
):
    x = x_ref[...]
    cond = cond_ref[...]
    eps = eps_ref[...]
    tb = x.shape[0]

    # ---- Encoder fc1: cat(x, cond) @ W1 + b1 as K=4 VPU broadcast-MACs (no MXU pass)
    ew1x = ew1x_ref[...]
    ew1c = ew1c_ref[...]
    h = eb1_ref[...] + x[:, 0:1] * ew1x[0:1, :]
    for k in range(1, INPUT_DIM):
        h = h + x[:, k:k + 1] * ew1x[k:k + 1, :]
    for k in range(CONDITION_DIM):
        h = h + cond[:, k:k + 1] * ew1c[k:k + 1, :]
    h = jnp.maximum(h, 0.0)  # relu

    # ---- Fused encoder heads: one lane-dense MXU pass -> [mu | logvar | 0...]
    mulv = jnp.dot(h, ewh_ref[...], preferred_element_type=jnp.float32) + ebh_ref[...]
    mu = mulv[:, :LATENT_DIM]
    logvar = mulv[:, LATENT_DIM:2 * LATENT_DIM]

    # ---- Reparameterize: z = mu + eps * exp(0.5 * logvar)
    z = mu + eps * jnp.exp(0.5 * logvar)

    # ---- Decoder fc1: z-part on the MXU, condition-part as K=2 VPU MACs
    dw1c = dw1c_ref[...]
    hd = jnp.dot(z, dw1z_ref[...], preferred_element_type=jnp.float32) + db1_ref[...]
    for k in range(CONDITION_DIM):
        hd = hd + cond[:, k:k + 1] * dw1c[k:k + 1, :]
    hd = jnp.maximum(hd, 0.0)  # relu

    # ---- Decoder fc2 + sigmoid (weight pre-padded so recon lands in lanes 40:42)
    recon_full = jax.nn.sigmoid(
        jnp.dot(hd, dw2_ref[...], preferred_element_type=jnp.float32) + db2_ref[...])

    # ---- Single unmasked, lane-dense store of the packed output slab
    col = lax.broadcasted_iota(jnp.int32, (tb, OUT_LANES), 1)
    out_ref[...] = jnp.where(col < RECON_OFF, mulv, recon_full)


def pack_params(params):
    """One-time (outside jit) repacking of PyTorch-style Linear params into the
    layout the kernel consumes. All slices/concats/pads happen here, not per call."""
    ewh = jnp.zeros((HIDDEN_DIM, OUT_LANES), jnp.float32)
    ewh = ewh.at[:, :LATENT_DIM].set(params["enc_w_mu"])
    ewh = ewh.at[:, LATENT_DIM:2 * LATENT_DIM].set(params["enc_w_lv"])
    ebh = jnp.zeros((1, OUT_LANES), jnp.float32)
    ebh = ebh.at[:, :LATENT_DIM].set(params["enc_b_mu"])
    ebh = ebh.at[:, LATENT_DIM:2 * LATENT_DIM].set(params["enc_b_lv"])

    dw2p = jnp.zeros((HIDDEN_DIM, OUT_LANES), jnp.float32)
    dw2p = dw2p.at[:, RECON_OFF:RECON_OFF + INPUT_DIM].set(params["dec_w2"])
    db2p = jnp.zeros((1, OUT_LANES), jnp.float32)
    db2p = db2p.at[:, RECON_OFF:RECON_OFF + INPUT_DIM].set(params["dec_b2"])

    return {
        "ew1x": params["enc_w1"][:INPUT_DIM, :],
        "ew1c": params["enc_w1"][INPUT_DIM:, :],
        "eb1": params["enc_b1"],
        "ewh": ewh,
        "ebh": ebh,
        "dw1z": params["dec_w1"][:LATENT_DIM, :],
        "dw1c": params["dec_w1"][LATENT_DIM:, :],
        "db1": params["dec_b1"],
        "dw2": dw2p,
        "db2": db2p,
    }


@jax.jit
def cvae_forward(x, condition, eps, kp):
    B = x.shape[0]
    # Batch tile: multiple of 8 sublanes, capped so per-step VMEM stays tiny on all
    # generations (well under the 32 MiB scoped default, and v7x's 64 MiB physical).
    TB = min(512, _round_up(max(B, 1), 8))
    grid = (pl.cdiv(B, TB),)

    weights = (kp["ew1x"], kp["ew1c"], kp["eb1"],
               kp["ewh"], kp["ebh"],
               kp["dw1z"], kp["dw1c"], kp["db1"],
               kp["dw2"], kp["db2"])

    def batch_spec(feat):
        return pl.BlockSpec((TB, feat), lambda i: (i, 0))

    def resident_spec(arr):
        # full-array block, constant index map -> stays VMEM-resident across grid steps
        return pl.BlockSpec(arr.shape, lambda i: (0, 0))

    in_specs = ([batch_spec(INPUT_DIM),
                 batch_spec(CONDITION_DIM),
                 batch_spec(LATENT_DIM)]
                + [resident_spec(w) for w in weights])

    packed = pl.pallas_call(
        cvae_kernel,
        grid=grid,
        out_shape=jax.ShapeDtypeStruct((B, OUT_LANES), jnp.float32),
        in_specs=in_specs,
        out_specs=pl.BlockSpec((TB, OUT_LANES), lambda i: (i, 0)),
        compiler_params=pltpu.CompilerParams(
            dimension_semantics=("parallel",)),
    )(x, condition, eps, *weights)

    mu = packed[:, :LATENT_DIM]
    logvar = packed[:, LATENT_DIM:2 * LATENT_DIM]
    recon = packed[:, RECON_OFF:RECON_OFF + INPUT_DIM]
    return recon, mu, logvar


def _linear_init(key, fan_in, fan_out):
    # deterministic init mimicking torch.nn.Linear default: U(-1/sqrt(fan_in), 1/sqrt(fan_in))
    kw, kb = jax.random.split(key)
    bound = 1.0 / jnp.sqrt(jnp.float32(fan_in))
    w = jax.random.uniform(kw, (fan_in, fan_out), jnp.float32, -bound, bound)
    b = jax.random.uniform(kb, (1, fan_out), jnp.float32, -bound, bound)
    return w, b


def init_params(key):
    keys = jax.random.split(key, 6)
    enc_w1, enc_b1 = _linear_init(keys[0], INPUT_DIM + CONDITION_DIM, HIDDEN_DIM)
    enc_w_mu, enc_b_mu = _linear_init(keys[1], HIDDEN_DIM, LATENT_DIM)
    enc_w_lv, enc_b_lv = _linear_init(keys[2], HIDDEN_DIM, LATENT_DIM)
    dec_w1, dec_b1 = _linear_init(keys[3], LATENT_DIM + CONDITION_DIM, HIDDEN_DIM)
    dec_w2, dec_b2 = _linear_init(keys[4], HIDDEN_DIM, INPUT_DIM)
    return {
        "enc_w1": enc_w1, "enc_b1": enc_b1,
        "enc_w_mu": enc_w_mu, "enc_b_mu": enc_b_mu,
        "enc_w_lv": enc_w_lv, "enc_b_lv": enc_b_lv,
        "dec_w1": dec_w1, "dec_b1": dec_b1,
        "dec_w2": dec_w2, "dec_b2": dec_b2,
    }


def _reference_forward(x, condition, eps, params):
    # pure-JAX reference mirroring the PyTorch module
    xc = jnp.concatenate([x, condition], axis=-1)
    h = jax.nn.relu(xc @ params["enc_w1"] + params["enc_b1"])
    mu = h @ params["enc_w_mu"] + params["enc_b_mu"]
    logvar = h @ params["enc_w_lv"] + params["enc_b_lv"]
    z = mu + eps * jnp.exp(0.5 * logvar)
    zc = jnp.concatenate([z, condition], axis=-1)
    hd = jax.nn.relu(zc @ params["dec_w1"] + params["dec_b1"])
    recon = jax.nn.sigmoid(hd @ params["dec_w2"] + params["dec_b2"])
    return recon, mu, logvar


if __name__ == "__main__":
    key = jax.random.PRNGKey(0)
    k_params, k_x, k_c, k_eps = jax.random.split(key, 4)

    B = 8
    params = init_params(k_params)
    kparams = pack_params(params)  # one-time repacking, outside the jitted forward
    x = jax.random.normal(k_x, (B, INPUT_DIM), jnp.float32)
    condition = jax.random.normal(k_c, (B, CONDITION_DIM), jnp.float32)
    eps = jax.random.normal(k_eps, (B, LATENT_DIM), jnp.float32)  # randn_like(std)

    recon, mu, logvar = cvae_forward(x, condition, eps, kparams)
    jax.block_until_ready((recon, mu, logvar))

    ref_recon, ref_mu, ref_logvar = _reference_forward(x, condition, eps, params)
    assert recon.shape == (B, INPUT_DIM)
    assert mu.shape == (B, LATENT_DIM)
    assert logvar.shape == (B, LATENT_DIM)
    assert jnp.allclose(recon, ref_recon, atol=1e-4, rtol=1e-4)
    assert jnp.allclose(mu, ref_mu, atol=1e-4, rtol=1e-4)
    assert jnp.allclose(logvar, ref_logvar, atol=1e-4, rtol=1e-4)

    print("KERNEL_OK")
</pallas_src>

<mosaic_0001>
module attributes {stable_mosaic.version = 11 : i64} {
  func.func @cvae_kernel(%arg0: i32, %arg1: memref<8x2xf32, #tpu.memory_space<vmem>>, %arg2: memref<8x2xf32, #tpu.memory_space<vmem>>, %arg3: memref<8x20xf32, #tpu.memory_space<vmem>>, %arg4: memref<2x128xf32, #tpu.memory_space<vmem>>, %arg5: memref<2x128xf32, #tpu.memory_space<vmem>>, %arg6: memref<1x128xf32, #tpu.memory_space<vmem>>, %arg7: memref<128x128xf32, #tpu.memory_space<vmem>>, %arg8: memref<1x128xf32, #tpu.memory_space<vmem>>, %arg9: memref<20x128xf32, #tpu.memory_space<vmem>>, %arg10: memref<2x128xf32, #tpu.memory_space<vmem>>, %arg11: memref<1x128xf32, #tpu.memory_space<vmem>>, %arg12: memref<128x128xf32, #tpu.memory_space<vmem>>, %arg13: memref<1x128xf32, #tpu.memory_space<vmem>>, %arg14: memref<8x128xf32, #tpu.memory_space<vmem>>) attributes {dimension_semantics = [#tpu.dimension_semantics<parallel>], iteration_bounds = array<i64: 1>, scalar_prefetch = 0 : i64, scratch_operands = 0 : i64, tpu.core_type = #tpu.core_type<tc>, window_params = [{transform_indices = @transform_0, window_bounds = array<i64: 8, 2>}, {transform_indices = @transform_1, window_bounds = array<i64: 8, 2>}, {transform_indices = @transform_2, window_bounds = array<i64: 8, 20>}, {pipeline_mode = #tpu.pipeline_mode<synchronous>, transform_indices = @transform_3, window_bounds = array<i64: 2, 128>}, {pipeline_mode = #tpu.pipeline_mode<synchronous>, transform_indices = @transform_4, window_bounds = array<i64: 2, 128>}, {pipeline_mode = #tpu.pipeline_mode<synchronous>, transform_indices = @transform_5, window_bounds = array<i64: 1, 128>}, {pipeline_mode = #tpu.pipeline_mode<synchronous>, transform_indices = @transform_6, window_bounds = array<i64: 128, 128>}, {pipeline_mode = #tpu.pipeline_mode<synchronous>, transform_indices = @transform_7, window_bounds = array<i64: 1, 128>}, {pipeline_mode = #tpu.pipeline_mode<synchronous>, transform_indices = @transform_8, window_bounds = array<i64: 20, 128>}, {pipeline_mode = #tpu.pipeline_mode<synchronous>, transform_indices = @transform_9, window_bounds = array<i64: 2, 128>}, {pipeline_mode = #tpu.pipeline_mode<synchronous>, transform_indices = @transform_10, window_bounds = array<i64: 1, 128>}, {pipeline_mode = #tpu.pipeline_mode<synchronous>, transform_indices = @transform_11, window_bounds = array<i64: 128, 128>}, {pipeline_mode = #tpu.pipeline_mode<synchronous>, transform_indices = @transform_12, window_bounds = array<i64: 1, 128>}, {transform_indices = @transform_13, window_bounds = array<i64: 8, 128>}]} {
    %c0 = arith.constant 0 : index
    %c0_0 = arith.constant 0 : index
    %0 = vector.load %arg1[%c0, %c0_0] : memref<8x2xf32, #tpu.memory_space<vmem>>, vector<8x2xf32>
    %c0_1 = arith.constant 0 : index
    %c0_2 = arith.constant 0 : index
    %1 = vector.load %arg2[%c0_1, %c0_2] : memref<8x2xf32, #tpu.memory_space<vmem>>, vector<8x2xf32>
    %c0_3 = arith.constant 0 : index
    %c0_4 = arith.constant 0 : index
    %2 = vector.load %arg3[%c0_3, %c0_4] : memref<8x20xf32, #tpu.memory_space<vmem>>, vector<8x20xf32>
    %c0_5 = arith.constant 0 : index
    %c0_6 = arith.constant 0 : index
    %3 = vector.load %arg4[%c0_5, %c0_6] : memref<2x128xf32, #tpu.memory_space<vmem>>, vector<2x128xf32>
    %c0_7 = arith.constant 0 : index
    %c0_8 = arith.constant 0 : index
    %4 = vector.load %arg5[%c0_7, %c0_8] : memref<2x128xf32, #tpu.memory_space<vmem>>, vector<2x128xf32>
    %c0_9 = arith.constant 0 : index
    %c0_10 = arith.constant 0 : index
    %5 = vector.load %arg6[%c0_9, %c0_10] : memref<1x128xf32, #tpu.memory_space<vmem>>, vector<1x128xf32>
    %6 = vector.extract_strided_slice %0 {offsets = [0, 0], sizes = [8, 1], strides = [1, 1]} : vector<8x2xf32> to vector<8x1xf32>
    %7 = vector.extract_strided_slice %3 {offsets = [0, 0], sizes = [1, 128], strides = [1, 1]} : vector<2x128xf32> to vector<1x128xf32>
    %8 = vector.broadcast %6 : vector<8x1xf32> to vector<8x128xf32>
    %9 = vector.broadcast %7 : vector<1x128xf32> to vector<8x128xf32>
    %10 = arith.mulf %8, %9 : vector<8x128xf32>
    %11 = vector.broadcast %5 : vector<1x128xf32> to vector<8x128xf32>
    %12 = arith.addf %11, %10 : vector<8x128xf32>
    %13 = vector.extract_strided_slice %0 {offsets = [0, 1], sizes = [8, 1], strides = [1, 1]} : vector<8x2xf32> to vector<8x1xf32>
    %14 = vector.extract_strided_slice %3 {offsets = [1, 0], sizes = [1, 128], strides = [1, 1]} : vector<2x128xf32> to vector<1x128xf32>
    %15 = vector.broadcast %13 : vector<8x1xf32> to vector<8x128xf32>
    %16 = vector.broadcast %14 : vector<1x128xf32> to vector<8x128xf32>
    %17 = arith.mulf %15, %16 : vector<8x128xf32>
    %18 = arith.addf %12, %17 : vector<8x128xf32>
    %19 = vector.extract_strided_slice %1 {offsets = [0, 0], sizes = [8, 1], strides = [1, 1]} : vector<8x2xf32> to vector<8x1xf32>
    %20 = vector.extract_strided_slice %4 {offsets = [0, 0], sizes = [1, 128], strides = [1, 1]} : vector<2x128xf32> to vector<1x128xf32>
    %21 = vector.broadcast %19 : vector<8x1xf32> to vector<8x128xf32>
    %22 = vector.broadcast %20 : vector<1x128xf32> to vector<8x128xf32>
    %23 = arith.mulf %21, %22 : vector<8x128xf32>
    %24 = arith.addf %18, %23 : vector<8x128xf32>
    %25 = vector.extract_strided_slice %1 {offsets = [0, 1], sizes = [8, 1], strides = [1, 1]} : vector<8x2xf32> to vector<8x1xf32>
    %26 = vector.extract_strided_slice %4 {offsets = [1, 0], sizes = [1, 128], strides = [1, 1]} : vector<2x128xf32> to vector<1x128xf32>
    %27 = vector.broadcast %25 : vector<8x1xf32> to vector<8x128xf32>
    %28 = vector.broadcast %26 : vector<1x128xf32> to vector<8x128xf32>
    %29 = arith.mulf %27, %28 : vector<8x128xf32>
    %30 = arith.addf %24, %29 : vector<8x128xf32>
    %cst = arith.constant 0.000000e+00 : f32
    %31 = vector.broadcast %cst : f32 to vector<8x128xf32>
    %32 = arith.maximumf %30, %31 : vector<8x128xf32>
    %c0_11 = arith.constant 0 : index
    %c0_12 = arith.constant 0 : index
    %33 = vector.load %arg7[%c0_11, %c0_12] : memref<128x128xf32, #tpu.memory_space<vmem>>, vector<128x128xf32>
    %cst_13 = arith.constant dense<0.000000e+00> : vector<8x128xf32>
    %34 = tpu.matmul %32, %33, %cst_13 {dimension_numbers = #tpu.dot_dimension_numbers<[1], [0], [0], [1], [0, 0, 1, 1], [], []>} : vector<8x128xf32>, vector<128x128xf32>, vector<8x128xf32> -> vector<8x128xf32>
    %c0_14 = arith.constant 0 : index
    %c0_15 = arith.constant 0 : index
    %35 = vector.load %arg8[%c0_14, %c0_15] : memref<1x128xf32, #tpu.memory_space<vmem>>, vector<1x128xf32>
    %36 = vector.broadcast %35 : vector<1x128xf32> to vector<8x128xf32>
    %37 = arith.addf %34, %36 : vector<8x128xf32>
    %38 = vector.extract_strided_slice %37 {offsets = [0, 0], sizes = [8, 20], strides = [1, 1]} : vector<8x128xf32> to vector<8x20xf32>
    %39 = vector.extract_strided_slice %37 {offsets = [0, 20], sizes = [8, 20], strides = [1, 1]} : vector<8x128xf32> to vector<8x20xf32>
    %cst_16 = arith.constant 5.000000e-01 : f32
    %40 = vector.broadcast %cst_16 : f32 to vector<8x20xf32>
    %41 = arith.mulf %40, %39 : vector<8x20xf32>
    %42 = math.exp %41 : vector<8x20xf32>
    %43 = arith.mulf %2, %42 : vector<8x20xf32>
    %44 = arith.addf %38, %43 : vector<8x20xf32>
    %c0_17 = arith.constant 0 : index
    %c0_18 = arith.constant 0 : index
    %45 = vector.load %arg10[%c0_17, %c0_18] : memref<2x128xf32, #tpu.memory_space<vmem>>, vector<2x128xf32>
    %c0_19 = arith.constant 0 : index
    %c0_20 = arith.constant 0 : index
    %46 = vector.load %arg9[%c0_19, %c0_20] : memref<20x128xf32, #tpu.memory_space<vmem>>, vector<20x128xf32>
    %cst_21 = arith.constant dense<0.000000e+00> : vector<8x128xf32>
    %47 = tpu.matmul %44, %46, %cst_21 {dimension_numbers = #tpu.dot_dimension_numbers<[1], [0], [0], [1], [0, 0, 1, 1], [], []>} : vector<8x20xf32>, vector<20x128xf32>, vector<8x128xf32> -> vector<8x128xf32>
    %c0_22 = arith.constant 0 : index
    %c0_23 = arith.constant 0 : index
    %48 = vector.load %arg11[%c0_22, %c0_23] : memref<1x128xf32, #tpu.memory_space<vmem>>, vector<1x128xf32>
    %49 = vector.broadcast %48 : vector<1x128xf32> to vector<8x128xf32>
    %50 = arith.addf %47, %49 : vector<8x128xf32>
    %51 = vector.extract_strided_slice %1 {offsets = [0, 0], sizes = [8, 1], strides = [1, 1]} : vector<8x2xf32> to vector<8x1xf32>
    %52 = vector.extract_strided_slice %45 {offsets = [0, 0], sizes = [1, 128], strides = [1, 1]} : vector<2x128xf32> to vector<1x128xf32>
    %53 = vector.broadcast %51 : vector<8x1xf32> to vector<8x128xf32>
    %54 = vector.broadcast %52 : vector<1x128xf32> to vector<8x128xf32>
    %55 = arith.mulf %53, %54 : vector<8x128xf32>
    %56 = arith.addf %50, %55 : vector<8x128xf32>
    %57 = vector.extract_strided_slice %1 {offsets = [0, 1], sizes = [8, 1], strides = [1, 1]} : vector<8x2xf32> to vector<8x1xf32>
    %58 = vector.extract_strided_slice %45 {offsets = [1, 0], sizes = [1, 128], strides = [1, 1]} : vector<2x128xf32> to vector<1x128xf32>
    %59 = vector.broadcast %57 : vector<8x1xf32> to vector<8x128xf32>
    %60 = vector.broadcast %58 : vector<1x128xf32> to vector<8x128xf32>
    %61 = arith.mulf %59, %60 : vector<8x128xf32>
    %62 = arith.addf %56, %61 : vector<8x128xf32>
    %cst_24 = arith.constant 0.000000e+00 : f32
    %63 = vector.broadcast %cst_24 : f32 to vector<8x128xf32>
    %64 = arith.maximumf %62, %63 : vector<8x128xf32>
    %c0_25 = arith.constant 0 : index
    %c0_26 = arith.constant 0 : index
    %65 = vector.load %arg12[%c0_25, %c0_26] : memref<128x128xf32, #tpu.memory_space<vmem>>, vector<128x128xf32>
    %cst_27 = arith.constant dense<0.000000e+00> : vector<8x128xf32>
    %66 = tpu.matmul %64, %65, %cst_27 {dimension_numbers = #tpu.dot_dimension_numbers<[1], [0], [0], [1], [0, 0, 1, 1], [], []>} : vector<8x128xf32>, vector<128x128xf32>, vector<8x128xf32> -> vector<8x128xf32>
    %c0_28 = arith.constant 0 : index
    %c0_29 = arith.constant 0 : index
    %67 = vector.load %arg13[%c0_28, %c0_29] : memref<1x128xf32, #tpu.memory_space<vmem>>, vector<1x128xf32>
    %68 = vector.broadcast %67 : vector<1x128xf32> to vector<8x128xf32>
    %69 = arith.addf %66, %68 : vector<8x128xf32>
    %70 = arith.negf %69 : vector<8x128xf32>
    %71 = math.exp %70 : vector<8x128xf32>
    %cst_30 = arith.constant 1.000000e+00 : f32
    %72 = vector.broadcast %cst_30 : f32 to vector<8x128xf32>
    %73 = arith.addf %72, %71 : vector<8x128xf32>
    %74 = arith.divf %72, %73 : vector<8x128xf32>
    %75 = tpu.iota {dimensions = array<i32: 1>} : vector<8x128xi32>
    %c40_i32 = arith.constant 40 : i32
    %76 = vector.broadcast %c40_i32 : i32 to vector<8x128xi32>
    %77 = arith.cmpi slt, %75, %76 : vector<8x128xi32>
    %78 = arith.select %77, %37, %74 : vector<8x128xi1>, vector<8x128xf32>
    %c0_31 = arith.constant 0 : index
    %c0_32 = arith.constant 0 : index
    %79 = vector.load %arg14[%c0_31, %c0_32] : memref<8x128xf32, #tpu.memory_space<vmem>>, vector<8x128xf32>
    tpu.vector_store %arg14[%c0_31, %c0_32], %78 {strides = array<i32>} : memref<8x128xf32, #tpu.memory_space<vmem>>, vector<8x128xf32>,
    return
  }
  func.func @transform_0(%arg0: i32) -> (i32, i32) {
    %c0_i32 = arith.constant 0 : i32
    %c0_i32_0 = arith.constant 0 : i32
    return %arg0, %c0_i32 : i32, i32
  }
  func.func @transform_1(%arg0: i32) -> (i32, i32) {
    %c0_i32 = arith.constant 0 : i32
    %c0_i32_0 = arith.constant 0 : i32
    return %arg0, %c0_i32 : i32, i32
  }
  func.func @transform_2(%arg0: i32) -> (i32, i32) {
    %c0_i32 = arith.constant 0 : i32
    %c0_i32_0 = arith.constant 0 : i32
    return %arg0, %c0_i32 : i32, i32
  }
  func.func @transform_3(%arg0: i32) -> (i32, i32) {
    %c0_i32 = arith.constant 0 : i32
    %c0_i32_0 = arith.constant 0 : i32
    %c0_i32_1 = arith.constant 0 : i32
    return %c0_i32, %c0_i32_0 : i32, i32
  }
  func.func @transform_4(%arg0: i32) -> (i32, i32) {
    %c0_i32 = arith.constant 0 : i32
    %c0_i32_0 = arith.constant 0 : i32
    %c0_i32_1 = arith.constant 0 : i32
    return %c0_i32, %c0_i32_0 : i32, i32
  }
  func.func @transform_5(%arg0: i32) -> (i32, i32) {
    %c0_i32 = arith.constant 0 : i32
    %c0_i32_0 = arith.constant 0 : i32
    %c0_i32_1 = arith.constant 0 : i32
    return %c0_i32, %c0_i32_0 : i32, i32
  }
  func.func @transform_6(%arg0: i32) -> (i32, i32) {
    %c0_i32 = arith.constant 0 : i32
    %c0_i32_0 = arith.constant 0 : i32
    %c0_i32_1 = arith.constant 0 : i32
    return %c0_i32, %c0_i32_0 : i32, i32
  }
  func.func @transform_7(%arg0: i32) -> (i32, i32) {
    %c0_i32 = arith.constant 0 : i32
    %c0_i32_0 = arith.constant 0 : i32
    %c0_i32_1 = arith.constant 0 : i32
    return %c0_i32, %c0_i32_0 : i32, i32
  }
  func.func @transform_8(%arg0: i32) -> (i32, i32) {
    %c0_i32 = arith.constant 0 : i32
    %c0_i32_0 = arith.constant 0 : i32
    %c0_i32_1 = arith.constant 0 : i32
    return %c0_i32, %c0_i32_0 : i32, i32
  }
  func.func @transform_9(%arg0: i32) -> (i32, i32) {
    %c0_i32 = arith.constant 0 : i32
    %c0_i32_0 = arith.constant 0 : i32
    %c0_i32_1 = arith.constant 0 : i32
    return %c0_i32, %c0_i32_0 : i32, i32
  }
  func.func @transform_10(%arg0: i32) -> (i32, i32) {
    %c0_i32 = arith.constant 0 : i32
    %c0_i32_0 = arith.constant 0 : i32
    %c0_i32_1 = arith.constant 0 : i32
    return %c0_i32, %c0_i32_0 : i32, i32
  }
  func.func @transform_11(%arg0: i32) -> (i32, i32) {
    %c0_i32 = arith.constant 0 : i32
    %c0_i32_0 = arith.constant 0 : i32
    %c0_i32_1 = arith.constant 0 : i32
    return %c0_i32, %c0_i32_0 : i32, i32
  }
  func.func @transform_12(%arg0: i32) -> (i32, i32) {
    %c0_i32 = arith.constant 0 : i32
    %c0_i32_0 = arith.constant 0 : i32
    %c0_i32_1 = arith.constant 0 : i32
    return %c0_i32, %c0_i32_0 : i32, i32
  }
  func.func @transform_13(%arg0: i32) -> (i32, i32) {
    %c0_i32 = arith.constant 0 : i32
    %c0_i32_0 = arith.constant 0 : i32
    return %arg0, %c0_i32 : i32, i32
  }
}

</mosaic_0001>

<llo_original>
// kernel: cvae_forward.1
$region0: #{cvae_forward.1}
  #allocation0 [shape = 'u32[]', space=smem, size = 0x4, offset = 0x4, fixed_abs, tag = 'smem constant byte address 0x4 - core index']
  #allocation1 [shape = 'u32[144,128]{1,0:T(1,128)}', space=vmem, size = 0x12000, scoped, tag = 'internal scratch']
  %s0 = inlined_call_operand.vmem [shape: f32[8,2], index: 0, kind: input, shape index: {}]
  %s1 = inlined_call_operand.vmem [shape: f32[8,2], index: 1, kind: input, shape index: {}]
  %s2 = inlined_call_operand.hbm [shape: f32[8,20], index: 2, kind: input, shape index: {}]
  %s3 = inlined_call_operand.vmem [shape: f32[2,128], index: 3, kind: input, shape index: {}]
  %s4 = inlined_call_operand.vmem [shape: f32[2,128], index: 4, kind: input, shape index: {}]
  %s5 = inlined_call_operand.vmem [shape: f32[1,128], index: 5, kind: input, shape index: {}]
  %s6 = inlined_call_operand.hbm [shape: f32[128,128], index: 6, kind: input, shape index: {}]
  %s7 = inlined_call_operand.vmem [shape: f32[1,128], index: 7, kind: input, shape index: {}]
  %s8 = inlined_call_operand.vmem [shape: f32[20,128], index: 8, kind: input, shape index: {}]
  %s9 = inlined_call_operand.vmem [shape: f32[2,128], index: 9, kind: input, shape index: {}]
  %s10 = inlined_call_operand.hbm [shape: f32[1,128], index: 10, kind: input, shape index: {}]
  %s11 = inlined_call_operand.hbm [shape: f32[128,128], index: 11, kind: input, shape index: {}]
  %s12 = inlined_call_operand.hbm [shape: f32[1,128], index: 12, kind: input, shape index: {}]
  %s13 = inlined_call_operand.vmem [shape: f32[8,128], index: 13, kind: output, shape index: {}]
  %s14 = sld [smem:[#allocation0]]
  $region82: #{cvae_forward.1} parent=0
    _
  %s16 = ssub.s32 1, %s14
  %s17 = scalar_select 0, %s16, %s14
  $region1: #{cvae_forward.1} parent=0
    #allocation2 [shape = 'u8[4096]{0}', space=vmem, size = 0x1000, scoped, tag = 'input window, operand 2, single buffered']
    #allocation3 [shape = 's32[1]{0}', space=sflag, size = 0x4, scoped, tag = 'scoped memory for cvae_forward.1']
    #allocation4 [shape = 'u8[65536]{0}', space=vmem, size = 0x10000, scoped, tag = 'input window, operand 6, single buffered']
    #allocation5 [shape = 's32[1]{0}', space=sflag, size = 0x4, scoped, tag = 'scoped memory for cvae_forward.1']
    #allocation6 [shape = 'u8[512]{0}', space=vmem, size = 0x400, scoped, tag = 'input window, operand 10, single buffered']
    #allocation7 [shape = 'u8[65536]{0}', space=vmem, size = 0x10000, scoped, tag = 'input window, operand 11, single buffered']
    #allocation8 [shape = 's32[1]{0}', space=sflag, size = 0x4, scoped, tag = 'scoped memory for cvae_forward.1']
    #allocation9 [shape = 'u8[512]{0}', space=vmem, size = 0x400, scoped, tag = 'input window, operand 12, single buffered']
    %18 = vsyncpa [#allocation3], 0
    %19 = vsyncpa [#allocation5], 0
    %20 = vsyncpa [#allocation8], 0
    // Predicated region
    $region2: #{cvae_forward.1} parent=1 // pred_check
      _
    $region3: #{cvae_forward.1} parent=1 // pred_check_branch
      %22 = sbr.rel (0) target = $region5
    $region4: #{cvae_forward.1} parent=1 // pred_region
      _
    $region5: #{cvae_forward.1} parent=1 // pred_fallthru
      _
    // Predicated region
    $region6: #{cvae_forward.1} parent=1 // pred_check
      _
    $region7: #{cvae_forward.1} parent=1 // pred_check_branch
      %24 = sbr.rel (0) target = $region9
    $region8: #{cvae_forward.1} parent=1 // pred_region
      _
    $region9: #{cvae_forward.1} parent=1 // pred_fallthru
      _
    // Predicated region
    $region10: #{cvae_forward.1} parent=1 // pred_check
      _
    $region11: #{cvae_forward.1} parent=1 // pred_check_branch
      %26 = sbr.rel (0) target = $region13
    $region12: #{cvae_forward.1} parent=1 // pred_region
      %s28 = ssub.s32 128, 128
      %29 = vsyncadd [#allocation3], %s28
      %s31 = sshll.u32 [#allocation2], 4
      %s32 = int_to_ptr.vmem [resolvable:$true] %s31
      %34 = dma.hbm_to_vmem [thread:$0]  %s2, 128, %s32, [#allocation3]
    $region13: #{cvae_forward.1} parent=1 // pred_fallthru
      _
    // Predicated region
    $region14: #{cvae_forward.1} parent=1 // pred_check
      _
    $region15: #{cvae_forward.1} parent=1 // pred_check_branch
      %36 = sbr.rel (0) target = $region17
    $region16: #{cvae_forward.1} parent=1 // pred_region
      _
    $region17: #{cvae_forward.1} parent=1 // pred_fallthru
      _
    // Predicated region
    $region18: #{cvae_forward.1} parent=1 // pred_check
      _
    $region19: #{cvae_forward.1} parent=1 // pred_check_branch
      %38 = sbr.rel (0) target = $region21
    $region20: #{cvae_forward.1} parent=1 // pred_region
      _
    $region21: #{cvae_forward.1} parent=1 // pred_fallthru
      _
    // Predicated region
    $region22: #{cvae_forward.1} parent=1 // pred_check
      _
    $region23: #{cvae_forward.1} parent=1 // pred_check_branch
      %40 = sbr.rel (0) target = $region25
    $region24: #{cvae_forward.1} parent=1 // pred_region
      _
    $region25: #{cvae_forward.1} parent=1 // pred_fallthru
      _
    // Predicated region
    $region26: #{cvae_forward.1} parent=1 // pred_check
      _
    $region27: #{cvae_forward.1} parent=1 // pred_check_branch
      %42 = sbr.rel (0) target = $region29
    $region28: #{cvae_forward.1} parent=1 // pred_region
      %s44 = ssub.s32 2048, 2048
      %45 = vsyncadd [#allocation5], %s44
      %s46 = sshll.u32 [#allocation4], 4
      %s47 = int_to_ptr.vmem [resolvable:$true] %s46
      %52 = dma.hbm_to_vmem [thread:$0]  %s6, 2048, %s47, [#allocation5], 128, 128, 8
    $region29: #{cvae_forward.1} parent=1 // pred_fallthru
      _
    // Predicated region
    $region30: #{cvae_forward.1} parent=1 // pred_check
      _
    $region31: #{cvae_forward.1} parent=1 // pred_check_branch
      %54 = sbr.rel (0) target = $region33
    $region32: #{cvae_forward.1} parent=1 // pred_region
      _
    $region33: #{cvae_forward.1} parent=1 // pred_fallthru
      _
    // Predicated region
    $region34: #{cvae_forward.1} parent=1 // pred_check
      _
    $region35: #{cvae_forward.1} parent=1 // pred_check_branch
      %56 = sbr.rel (0) target = $region37
    $region36: #{cvae_forward.1} parent=1 // pred_region
      _
    $region37: #{cvae_forward.1} parent=1 // pred_fallthru
      _
    // Predicated region
    $region38: #{cvae_forward.1} parent=1 // pred_check
      _
    $region39: #{cvae_forward.1} parent=1 // pred_check_branch
      %58 = sbr.rel (0) target = $region41
    $region40: #{cvae_forward.1} parent=1 // pred_region
      _
    $region41: #{cvae_forward.1} parent=1 // pred_fallthru
      _
    // Predicated region
    $region42: #{cvae_forward.1} parent=1 // pred_check
      _
    $region43: #{cvae_forward.1} parent=1 // pred_check_branch
      %60 = sbr.rel (0) target = $region45
    $region44: #{cvae_forward.1} parent=1 // pred_region
      %s62 = ssub.s32 16, 16
      %63 = vsyncadd [#allocation5], %s62
      %s65 = sshll.u32 [#allocation6], 4
      %s66 = int_to_ptr.vmem [resolvable:$true] %s65
      %68 = dma.hbm_to_vmem [thread:$0]  %s10, 16, %s66, [#allocation5]
    $region45: #{cvae_forward.1} parent=1 // pred_fallthru
      _
    // Predicated region
    $region46: #{cvae_forward.1} parent=1 // pred_check
      _
    $region47: #{cvae_forward.1} parent=1 // pred_check_branch
      %70 = sbr.rel (0) target = $region49
    $region48: #{cvae_forward.1} parent=1 // pred_region
      %s72 = ssub.s32 2048, 2048
      %73 = vsyncadd [#allocation8], %s72
      %s74 = sshll.u32 [#allocation7], 4
      %s75 = int_to_ptr.vmem [resolvable:$true] %s74
      %80 = dma.hbm_to_vmem [thread:$0]  %s11, 2048, %s75, [#allocation8], 128, 128, 8
    $region49: #{cvae_forward.1} parent=1 // pred_fallthru
      _
    // Predicated region
    $region50: #{cvae_forward.1} parent=1 // pred_check
      _
    $region51: #{cvae_forward.1} parent=1 // pred_check_branch
      %82 = sbr.rel (0) target = $region53
    $region52: #{cvae_forward.1} parent=1 // pred_region
      %s84 = ssub.s32 16, 16
      %85 = vsyncadd [#allocation8], %s84
      %s87 = sshll.u32 [#allocation9], 4
      %s88 = int_to_ptr.vmem [resolvable:$true] %s87
      %90 = dma.hbm_to_vmem [thread:$0]  %s12, 16, %s88, [#allocation8]
    $region53: #{cvae_forward.1} parent=1 // pred_fallthru
      _
    // Predicated region
    $region54: #{cvae_forward.1} parent=1 // pred_check
      _
    $region55: #{cvae_forward.1} parent=1 // pred_check_branch
      %92 = sbr.rel (0) target = $region57
    $region56: #{cvae_forward.1} parent=1 // pred_region
      %93 = dma.done [#allocation3], 128
    $region57: #{cvae_forward.1} parent=1 // pred_fallthru
      _
    // Predicated region
    $region58: #{cvae_forward.1} parent=1 // pred_check
      _
    $region59: #{cvae_forward.1} parent=1 // pred_check_branch
      %95 = sbr.rel (0) target = $region61
    $region60: #{cvae_forward.1} parent=1 // pred_region
      %96 = dma.done [#allocation5], 2048
    $region61: #{cvae_forward.1} parent=1 // pred_fallthru
      _
    // Predicated region
    $region62: #{cvae_forward.1} parent=1 // pred_check
      _
    $region63: #{cvae_forward.1} parent=1 // pred_check_branch
      %98 = sbr.rel (0) target = $region65
    $region64: #{cvae_forward.1} parent=1 // pred_region
      %99 = dma.done [#allocation5], 16
    $region65: #{cvae_forward.1} parent=1 // pred_fallthru
      _
    // Predicated region
    $region66: #{cvae_forward.1} parent=1 // pred_check
      _
    $region67: #{cvae_forward.1} parent=1 // pred_check_branch
      %101 = sbr.rel (0) target = $region69
    $region68: #{cvae_forward.1} parent=1 // pred_region
      %102 = dma.done [#allocation8], 2048
    $region69: #{cvae_forward.1} parent=1 // pred_fallthru
      _
    // Predicated region
    $region70: #{cvae_forward.1} parent=1 // pred_check
      _
    $region71: #{cvae_forward.1} parent=1 // pred_check_branch
      %104 = sbr.rel (0) target = $region73
    $region72: #{cvae_forward.1} parent=1 // pred_region
      %105 = dma.done [#allocation8], 16
    $region73: #{cvae_forward.1} parent=1 // pred_fallthru
      _
    %v106 = vld [vmem:[%s0] sm:$0xff]
    %v107 = vld [vmem:[%s1] sm:$0xff]
    %v108 = vld [vmem:[#allocation2] sm:$0xff]
    %v109 = vld [vmem:[%s3] sm:$0x3]
    %v110 = vld [vmem:[%s4] sm:$0x3]
    %v111 = vld [vmem:[%s5] sm:$0x1]
    %113 = vset.pattern.permute.xlu0 0
    %114 = vperm.xlu0 %113, %v106
    %v115 = vpop.permute.xlu0 %114
    %v117 = vlaneseq
    %v118 = vshrl.u32 %v117, 7
    %v119 = vsub.s32 0, %v118
    %v120 = vrot.slane %v109, %v119
    %v121 = vmul.f32 %v115, %v120
    %v123 = vlaneseq
    %v124 = vshrl.u32 %v123, 7
    %v125 = vsub.s32 0, %v124
    %v126 = vrot.slane %v111, %v125
    %v128 = vadd.f32 %v126, %v121
    %129 = vset.pattern.permute.xlu0 1
    %130 = vperm.xlu0 %129, %v106
    %v131 = vpop.permute.xlu0 %130
    %v133 = vlaneseq
    %v134 = vshrl.u32 %v133, 7
    %v135 = vsub.s32 1, %v134
    %v136 = vrot.slane %v109, %v135
    %v137 = vmul.f32 %v131, %v136
    %v138 = vadd.f32 %v128, %v137
    %140 = vset.pattern.permute.xlu0 0
    %141 = vperm.xlu0 %140, %v107
    %v142 = vpop.permute.xlu0 %141
    %v144 = vlaneseq
    %v145 = vshrl.u32 %v144, 7
    %v146 = vsub.s32 0, %v145
    %v147 = vrot.slane %v110, %v146
    %v148 = vmul.f32 %v142, %v147
    %v149 = vadd.f32 %v138, %v148
    %150 = vset.pattern.permute.xlu0 1
    %151 = vperm.xlu0 %150, %v107
    %v152 = vpop.permute.xlu0 %151
    %v154 = vlaneseq
    %v155 = vshrl.u32 %v154, 7
    %v156 = vsub.s32 1, %v155
    %v157 = vrot.slane %v110, %v156
    %v158 = vmul.f32 %v152, %v157
    %v159 = vadd.f32 %v149, %v158
    %v160 = vmax.f32 %v159, 0.0
    %v161 = vld [vmem:[#allocation4] sm:$0xff]
    %v162 = vld [vmem:[#allocation4 + $0x8] sm:$0xff]
    %v163 = vld [vmem:[#allocation4 + $0x10] sm:$0xff]
    %v164 = vld [vmem:[#allocation4 + $0x18] sm:$0xff]
    %v165 = vld [vmem:[#allocation4 + $0x20] sm:$0xff]
    %v166 = vld [vmem:[#allocation4 + $0x28] sm:$0xff]
    %v167 = vld [vmem:[#allocation4 + $0x30] sm:$0xff]
    %v168 = vld [vmem:[#allocation4 + $0x38] sm:$0xff]
    %v169 = vld [vmem:[#allocation4 + $0x40] sm:$0xff]
    %v170 = vld [vmem:[#allocation4 + $0x48] sm:$0xff]
    %v171 = vld [vmem:[#allocation4 + $0x50] sm:$0xff]
    %v172 = vld [vmem:[#allocation4 + $0x58] sm:$0xff]
    %v173 = vld [vmem:[#allocation4 + $0x60] sm:$0xff]
    %v174 = vld [vmem:[#allocation4 + $0x68] sm:$0xff]
    %v175 = vld [vmem:[#allocation4 + $0x70] sm:$0xff]
    %v176 = vld [vmem:[#allocation4 + $0x78] sm:$0xff]
    %v177 = vld [vmem:[%s7] sm:$0x1]
    %v179 = vlaneseq
    %v180 = vshrl.u32 %v179, 7
    %v181 = vsub.s32 0, %v180
    %v182 = vrot.slane %v177, %v181
    %184 = vmatprep.subr.mxu0 0.0
    %185 = vmatpush1.msra.mxu0 %v176
    %186 = vmatprep.subr.mxu0 0.0
    %187 = vmatpush1.msra.mxu0 %v175
    %188 = vmatprep.subr.mxu0 0.0
    %189 = vmatpush1.msra.mxu0 %v174
    %190 = vmatprep.subr.mxu0 0.0
    %191 = vmatpush1.msra.mxu0 %v173
    %192 = vmatprep.subr.mxu0 0.0
    %193 = vmatpush1.msra.mxu0 %v172
    %194 = vmatprep.subr.mxu0 0.0
    %195 = vmatpush1.msra.mxu0 %v171
    %196 = vmatprep.subr.mxu0 0.0
    %197 = vmatpush1.msra.mxu0 %v170
    %198 = vmatprep.subr.mxu0 0.0
    %199 = vmatpush1.msra.mxu0 %v169
    %200 = vmatprep.subr.mxu0 0.0
    %201 = vmatpush1.msra.mxu0 %v168
    %202 = vmatprep.subr.mxu0 0.0
    %203 = vmatpush1.msra.mxu0 %v167
    %204 = vmatprep.subr.mxu0 0.0
    %205 = vmatpush1.msra.mxu0 %v166
    %206 = vmatprep.subr.mxu0 0.0
    %207 = vmatpush1.msra.mxu0 %v165
    %208 = vmatprep.subr.mxu0 0.0
    %209 = vmatpush1.msra.mxu0 %v164
    %210 = vmatprep.subr.mxu0 0.0
    %211 = vmatpush1.msra.mxu0 %v163
    %212 = vmatprep.subr.mxu0 0.0
    %213 = vmatpush1.msra.mxu0 %v162
    %214 = vmatprep.subr.mxu0 0.0
    %215 = vmatpush1.msra.mxu0 %v161
    %216 = vmatprep.subr.mxu0 0.0
    %217 = vmatpush2.msra.mxu0 0.0
    %218 = vmatprep.subr.mxu0 0.0
    %219 = vmatpush2.msra.mxu0 0.0
    %220 = vmatprep.subr.mxu0 0.0
    %221 = vmatpush2.msra.mxu0 0.0
    %222 = vmatprep.subr.mxu0 0.0
    %223 = vmatpush2.msra.mxu0 0.0
    %224 = vmatprep.subr.mxu0 0.0
    %225 = vmatpush2.msra.mxu0 0.0
    %226 = vmatprep.subr.mxu0 0.0
    %227 = vmatpush2.msra.mxu0 0.0
    %228 = vmatprep.subr.mxu0 0.0
    %229 = vmatpush2.msra.mxu0 0.0
    %230 = vmatprep.subr.mxu0 0.0
    %231 = vmatpush2.msra.mxu0 0.0
    %232 = vmatprep.subr.mxu0 0.0
    %233 = vmatpush2.msra.mxu0 0.0
    %234 = vmatprep.subr.mxu0 0.0
    %235 = vmatpush2.msra.mxu0 0.0
    %236 = vmatprep.subr.mxu0 0.0
    %237 = vmatpush2.msra.mxu0 0.0
    %238 = vmatprep.subr.mxu0 0.0
    %239 = vmatpush2.msra.mxu0 0.0
    %240 = vmatprep.subr.mxu0 0.0
    %241 = vmatpush2.msra.mxu0 0.0
    %242 = vmatprep.subr.mxu0 0.0
    %243 = vmatpush2.msra.mxu0 0.0
    %244 = vmatprep.subr.mxu0 0.0
    %245 = vmatpush2.msra.mxu0 0.0
    %246 = vmatprep.subr.mxu0 0.0
    %247 = vmatpush2.msra.mxu0 0.0
    %248 = vmatprep.mubr.f32.mxu0 0.0
    %249 = vmatmul.mubr.f32.gmra.mxu0 %v160
    %v250 = vpop.f32.mrf.mxu0
    %v251 = vadd.f32 %v182, %v250
    %v252 = vpop.f32.mrf.mxu0
    %253 = vdwg.mxu0
    %v254 = vmul.f32 %v251, 0.5
    %v255 = vmul.f32 %v254, 1.442695
    %v256 = vpow.pop %v255
    %258 = vrot.lane.b32.xlu0 %v256, 108
    %v259 = vpop.permute.xlu0 %258
    %v261 = vmul.f32 %v108, %v259
    %v262 = vadd.f32 %v251, %v261
    %v263 = vld [vmem:[%s9] sm:$0x3]
    %v264 = vld [vmem:[%s8] sm:$0xff]
    %v265 = vld [vmem:[%s8 + $0x8] sm:$0xff]
    %v266 = vld [vmem:[%s8 + $0x10] sm:$0xf]
    %v267 = vld [vmem:[#allocation6] sm:$0x1]
    %v269 = vlaneseq
    %v270 = vshrl.u32 %v269, 7
    %v271 = vsub.s32 0, %v270
    %v272 = vrot.slane %v267, %v271
    %vm274 = vcmask 162816
    %v276 = vsel %vm274, %v262, 0
    %vm278 = vcmask 1043456
    %v280 = vsel %vm278, %v266, 0
    %282 = vmatprep.subr.mxu0 0.0
    %283 = vmatpush1.msra.mxu0 0.0
    %284 = vmatprep.subr.mxu0 0.0
    %285 = vmatpush1.msra.mxu0 0.0
    %286 = vmatprep.subr.mxu0 0.0
    %287 = vmatpush1.msra.mxu0 0.0
    %288 = vmatprep.subr.mxu0 0.0
    %289 = vmatpush1.msra.mxu0 0.0
    %290 = vmatprep.subr.mxu0 0.0
    %291 = vmatpush1.msra.mxu0 0.0
    %292 = vmatprep.subr.mxu0 0.0
    %293 = vmatpush1.msra.mxu0 0.0
    %294 = vmatprep.subr.mxu0 0.0
    %295 = vmatpush1.msra.mxu0 0.0
    %296 = vmatprep.subr.mxu0 0.0
    %297 = vmatpush1.msra.mxu0 0.0
    %298 = vmatprep.subr.mxu0 0.0
    %299 = vmatpush1.msra.mxu0 0.0
    %300 = vmatprep.subr.mxu0 0.0
    %301 = vmatpush1.msra.mxu0 0.0
    %302 = vmatprep.subr.mxu0 0.0
    %303 = vmatpush1.msra.mxu0 0.0
    %304 = vmatprep.subr.mxu0 0.0
    %305 = vmatpush1.msra.mxu0 0.0
    %306 = vmatprep.subr.mxu0 0.0
    %307 = vmatpush1.msra.mxu0 0.0
    %308 = vmatprep.subr.mxu0 0.0
    %309 = vmatpush1.msra.mxu0 %v280
    %310 = vmatprep.subr.mxu0 0.0
    %311 = vmatpush1.msra.mxu0 %v265
    %312 = vmatprep.subr.mxu0 0.0
    %313 = vmatpush1.msra.mxu0 %v264
    %314 = vmatprep.subr.mxu0 0.0
    %315 = vmatpush2.msra.mxu0 0.0
    %316 = vmatprep.subr.mxu0 0.0
    %317 = vmatpush2.msra.mxu0 0.0
    %318 = vmatprep.subr.mxu0 0.0
    %319 = vmatpush2.msra.mxu0 0.0
    %320 = vmatprep.subr.mxu0 0.0
    %321 = vmatpush2.msra.mxu0 0.0
    %322 = vmatprep.subr.mxu0 0.0
    %323 = vmatpush2.msra.mxu0 0.0
    %324 = vmatprep.subr.mxu0 0.0
    %325 = vmatpush2.msra.mxu0 0.0
    %326 = vmatprep.subr.mxu0 0.0
    %327 = vmatpush2.msra.mxu0 0.0
    %328 = vmatprep.subr.mxu0 0.0
    %329 = vmatpush2.msra.mxu0 0.0
    %330 = vmatprep.subr.mxu0 0.0
    %331 = vmatpush2.msra.mxu0 0.0
    %332 = vmatprep.subr.mxu0 0.0
    %333 = vmatpush2.msra.mxu0 0.0
    %334 = vmatprep.subr.mxu0 0.0
    %335 = vmatpush2.msra.mxu0 0.0
    %336 = vmatprep.subr.mxu0 0.0
    %337 = vmatpush2.msra.mxu0 0.0
    %338 = vmatprep.subr.mxu0 0.0
    %339 = vmatpush2.msra.mxu0 0.0
    %340 = vmatprep.subr.mxu0 0.0
    %341 = vmatpush2.msra.mxu0 0.0
    %342 = vmatprep.subr.mxu0 0.0
    %343 = vmatpush2.msra.mxu0 0.0
    %344 = vmatprep.subr.mxu0 0.0
    %345 = vmatpush2.msra.mxu0 0.0
    %346 = vmatprep.mubr.f32.mxu0 0.0
    %347 = vmatmul.mubr.f32.gmra.mxu0 %v276
    %v348 = vpop.f32.mrf.mxu0
    %v349 = vadd.f32 %v272, %v348
    %v350 = vpop.f32.mrf.mxu0
    %351 = vdwg.mxu0
    %v352 = vlaneseq
    %v353 = vshrl.u32 %v352, 7
    %v354 = vsub.s32 0, %v353
    %v355 = vrot.slane %v263, %v354
    %v356 = vmul.f32 %v142, %v355
    %v357 = vadd.f32 %v349, %v356
    %v358 = vlaneseq
    %v359 = vshrl.u32 %v358, 7
    %v360 = vsub.s32 1, %v359
    %v361 = vrot.slane %v263, %v360
    %v362 = vmul.f32 %v152, %v361
    %v363 = vadd.f32 %v357, %v362
    %v364 = vmax.f32 %v363, 0.0
    %v365 = vld [vmem:[#allocation7] sm:$0xff]
    %v366 = vld [vmem:[#allocation7 + $0x8] sm:$0xff]
    %v367 = vld [vmem:[#allocation7 + $0x10] sm:$0xff]
    %v368 = vld [vmem:[#allocation7 + $0x18] sm:$0xff]
    %v369 = vld [vmem:[#allocation7 + $0x20] sm:$0xff]
    %v370 = vld [vmem:[#allocation7 + $0x28] sm:$0xff]
    %v371 = vld [vmem:[#allocation7 + $0x30] sm:$0xff]
    %v372 = vld [vmem:[#allocation7 + $0x38] sm:$0xff]
    %v373 = vld [vmem:[#allocation7 + $0x40] sm:$0xff]
    %v374 = vld [vmem:[#allocation7 + $0x48] sm:$0xff]
    %v375 = vld [vmem:[#allocation7 + $0x50] sm:$0xff]
    %v376 = vld [vmem:[#allocation7 + $0x58] sm:$0xff]
    %v377 = vld [vmem:[#allocation7 + $0x60] sm:$0xff]
    %v378 = vld [vmem:[#allocation7 + $0x68] sm:$0xff]
    %v379 = vld [vmem:[#allocation7 + $0x70] sm:$0xff]
    %v380 = vld [vmem:[#allocation7 + $0x78] sm:$0xff]
    %v381 = vld [vmem:[#allocation9] sm:$0x1]
    %v383 = vlaneseq
    %v384 = vshrl.u32 %v383, 7
    %v385 = vsub.s32 0, %v384
    %v386 = vrot.slane %v381, %v385
    %388 = vmatprep.subr.mxu0 0.0
    %389 = vmatpush1.msra.mxu0 %v380
    %390 = vmatprep.subr.mxu0 0.0
    %391 = vmatpush1.msra.mxu0 %v379
    %392 = vmatprep.subr.mxu0 0.0
    %393 = vmatpush1.msra.mxu0 %v378
    %394 = vmatprep.subr.mxu0 0.0
    %395 = vmatpush1.msra.mxu0 %v377
    %396 = vmatprep.subr.mxu0 0.0
    %397 = vmatpush1.msra.mxu0 %v376
    %398 = vmatprep.subr.mxu0 0.0
    %399 = vmatpush1.msra.mxu0 %v375
    %400 = vmatprep.subr.mxu0 0.0
    %401 = vmatpush1.msra.mxu0 %v374
    %402 = vmatprep.subr.mxu0 0.0
    %403 = vmatpush1.msra.mxu0 %v373
    %404 = vmatprep.subr.mxu0 0.0
    %405 = vmatpush1.msra.mxu0 %v372
    %406 = vmatprep.subr.mxu0 0.0
    %407 = vmatpush1.msra.mxu0 %v371
    %408 = vmatprep.subr.mxu0 0.0
    %409 = vmatpush1.msra.mxu0 %v370
    %410 = vmatprep.subr.mxu0 0.0
    %411 = vmatpush1.msra.mxu0 %v369
    %412 = vmatprep.subr.mxu0 0.0
    %413 = vmatpush1.msra.mxu0 %v368
    %414 = vmatprep.subr.mxu0 0.0
    %415 = vmatpush1.msra.mxu0 %v367
    %416 = vmatprep.subr.mxu0 0.0
    %417 = vmatpush1.msra.mxu0 %v366
    %418 = vmatprep.subr.mxu0 0.0
    %419 = vmatpush1.msra.mxu0 %v365
    %420 = vmatprep.subr.mxu0 0.0
    %421 = vmatpush2.msra.mxu0 0.0
    %422 = vmatprep.subr.mxu0 0.0
    %423 = vmatpush2.msra.mxu0 0.0
    %424 = vmatprep.subr.mxu0 0.0
    %425 = vmatpush2.msra.mxu0 0.0
    %426 = vmatprep.subr.mxu0 0.0
    %427 = vmatpush2.msra.mxu0 0.0
    %428 = vmatprep.subr.mxu0 0.0
    %429 = vmatpush2.msra.mxu0 0.0
    %430 = vmatprep.subr.mxu0 0.0
    %431 = vmatpush2.msra.mxu0 0.0
    %432 = vmatprep.subr.mxu0 0.0
    %433 = vmatpush2.msra.mxu0 0.0
    %434 = vmatprep.subr.mxu0 0.0
    %435 = vmatpush2.msra.mxu0 0.0
    %436 = vmatprep.subr.mxu0 0.0
    %437 = vmatpush2.msra.mxu0 0.0
    %438 = vmatprep.subr.mxu0 0.0
    %439 = vmatpush2.msra.mxu0 0.0
    %440 = vmatprep.subr.mxu0 0.0
    %441 = vmatpush2.msra.mxu0 0.0
    %442 = vmatprep.subr.mxu0 0.0
    %443 = vmatpush2.msra.mxu0 0.0
    %444 = vmatprep.subr.mxu0 0.0
    %445 = vmatpush2.msra.mxu0 0.0
    %446 = vmatprep.subr.mxu0 0.0
    %447 = vmatpush2.msra.mxu0 0.0
    %448 = vmatprep.subr.mxu0 0.0
    %449 = vmatpush2.msra.mxu0 0.0
    %450 = vmatprep.subr.mxu0 0.0
    %451 = vmatpush2.msra.mxu0 0.0
    %452 = vmatprep.mubr.f32.mxu0 0.0
    %453 = vmatmul.mubr.f32.gmra.mxu0 %v364
    %v454 = vpop.f32.mrf.mxu0
    %v455 = vadd.f32 %v386, %v454
    %v456 = vpop.f32.mrf.mxu0
    %457 = vdwg.mxu0
    %v458 = vxor.u32 %v455, 2147483648
    %v459 = vmul.f32 %v458, 1.442695
    %v460 = vpow.pop %v459
    %v461 = vadd.f32 %v460, 1.0
    %v462 = vrcp.pop %v461
    %v463 = vmul.f32 1.0, %v462
    %v464 = vlaneseq
    %v465 = vand.u32 %v464, 127
    %vm466 = vcmp.lt.s32.totalorder %v465, 40
    %v467 = vsel %vm466, %v251, %v463
    %468 = vst [vmem:[%s13] sm:$0xff] %v467
    // Predicated region
    $region74: #{cvae_forward.1} parent=1 // pred_check
      _
    $region75: #{cvae_forward.1} parent=1 // pred_check_branch
      %470 = sbr.rel (0) target = $region77
    $region76: #{cvae_forward.1} parent=1 // pred_region
      _
    $region77: #{cvae_forward.1} parent=1 // pred_fallthru
      _
    // Predicated region
    $region78: #{cvae_forward.1} parent=1 // pred_check
      _
    $region79: #{cvae_forward.1} parent=1 // pred_check_branch
      %472 = sbr.rel (0) target = $region81
    $region80: #{cvae_forward.1} parent=1 // pred_region
      _
    $region81: #{cvae_forward.1} parent=1 // pred_fallthru
      _
    %473 = vsyncpa [#allocation3], 1
    %474 = vsyncpa [#allocation5], 1
    %475 = vsyncpa [#allocation8], 1

</llo_original>
